<compile_context>
chip_gen: v5e
topology: v5e:2x2
jax: 0.10.0
libtpu: 0.0.40
codegen_flags: <defaults>
</compile_context>

<pallas_src>
import jax
import jax.numpy as jnp
from jax.experimental import pallas as pl
from jax.experimental.pallas import tpu as pltpu


def _h_swish_kernel(x_ref, o_ref):
    x = x_ref[...].astype(jnp.float32)
    t = jnp.clip(x + 3.0, 0.0, 6.0) * (1.0 / 6.0)   # relu6(x+3)/6
    o_ref[...] = (t * x).astype(o_ref.dtype)


def _round_up(v, m):
    return -(-v // m) * m


def _tpu_generation():
    """Best-effort TPU generation detection (5, 6, 7, ...). None if unknown."""
    try:
        kind = jax.devices()[0].device_kind.lower()
    except Exception:
        return None
    for tag, gen in (("v7", 7), ("7x", 7), ("v6", 6), ("v5", 5), ("v4", 4)):
        if tag in kind:
            return gen
    return None


_GEN = _tpu_generation()

# Per-generation block-size target (bytes of one input tile):
#   v5e      : 2 MiB  -> 8 MiB VMEM with double-buffered in+out, under its 16 MiB default
#   v6e/v7x  : 4 MiB  -> 16 MiB VMEM, under the 32 MiB default (no vmem_limit flag needed)
if _GEN is not None and _GEN >= 6:
    _TARGET_BLOCK_BYTES = 4 * 1024 * 1024
else:
    _TARGET_BLOCK_BYTES = 2 * 1024 * 1024

_IS_V7X = _GEN is not None and _GEN >= 7
# On v7x only bother core-sharding when there is real work to split.
_V7X_MIN_SPLIT_BYTES = 1 * 1024 * 1024


def _h_swish_2d(x2d):
    rows, lanes = x2d.shape
    itemsize = jnp.dtype(x2d.dtype).itemsize
    total_bytes = rows * lanes * itemsize

    # Rows per block: ~target bytes, rounded down to a multiple of 32
    # (legal sublane tile count for f32/bf16/int8 packed layouts).
    target_rows = max(32, (_TARGET_BLOCK_BYTES // (lanes * itemsize)) // 32 * 32)

    if rows <= target_rows:
        if _IS_V7X and total_bytes > _V7X_MIN_SPLIT_BYTES and rows >= 64:
            # v7x has 2 TensorCores, each with its own HBM path: force >= 2
            # grid steps so CORE_PARALLEL can shard the streaming across them.
            tr = min(rows, max(32, _round_up(pl.cdiv(rows, 2), 32)))
        else:
            tr = rows                      # single full-extent block (always legal)
    else:
        tr = target_rows
        if _IS_V7X:
            # Prefer an even number of steps so both cores get equal work.
            steps = pl.cdiv(rows, tr)
            if steps > 1 and steps % 2 == 1:
                tr = max(32, _round_up(pl.cdiv(rows, steps + 1), 32))

    steps = pl.cdiv(rows, tr)
    grid = (steps,)       # partial last block: masked writes, safe for elementwise

    if _IS_V7X and steps >= 2 and hasattr(pltpu, "CORE_PARALLEL"):
        semantics = (pltpu.CORE_PARALLEL,)   # actually shards steps across the 2 TCs
    else:
        semantics = ("parallel",)            # no-op vs "arbitrary" on 1-TC chips

    return pl.pallas_call(
        _h_swish_kernel,
        out_shape=jax.ShapeDtypeStruct((rows, lanes), x2d.dtype),
        grid_spec=pltpu.PrefetchScalarGridSpec(
            num_scalar_prefetch=0,
            grid=grid,
            in_specs=[pl.BlockSpec((tr, lanes), lambda i: (i, 0))],
            out_specs=pl.BlockSpec((tr, lanes), lambda i: (i, 0)),
        ),
        compiler_params=pltpu.CompilerParams(dimension_semantics=semantics),
        cost_estimate=pl.CostEstimate(
            flops=5 * rows * lanes,
            transcendentals=0,
            bytes_accessed=2 * rows * lanes * itemsize,
        ),
    )(x2d)


@jax.jit
def h_swish(x):
    """Elementwise hard-swish: relu6(x + 3) / 6 * x. Any shape / float dtype."""
    orig_shape = x.shape
    n = x.size
    if n == 0:
        return x

    flat = x.reshape(-1)

    # Widest lane count (multiple of 128) dividing n exactly -> free reshape view.
    lanes = None
    for cand in (1024, 512, 256, 128):
        if n % cand == 0:
            lanes = cand
            break

    if lanes is not None:
        out_flat = _h_swish_2d(flat.reshape(n // lanes, lanes)).reshape(-1)
    else:
        # Rare ragged fallback (element count not a multiple of 128): one fused
        # XLA elementwise pass is already at the HBM roofline (1.0x traffic) and
        # avoids the extra full-tensor read+write of a bulk-kernel+concatenate.
        # Same f32 math as the kernel, so rounding is consistent everywhere.
        # TODO(synk): if ragged shapes ever become hot, handle the <128-elem
        # tail inside the kernel with a masked pltpu.store instead.
        xf = flat.astype(jnp.float32)
        out_flat = (jnp.clip(xf + 3.0, 0.0, 6.0) * (1.0 / 6.0) * xf).astype(flat.dtype)

    return out_flat.reshape(orig_shape)


def _h_swish_ref(x):
    xf = x.astype(jnp.float32)
    return (jnp.clip(xf + 3.0, 0.0, 6.0) * (1.0 / 6.0) * xf).astype(x.dtype)


if __name__ == "__main__":
    key = jax.random.PRNGKey(0)

    # Shape implied by the module's usage (NCHW activation tensor).
    x = jax.random.normal(key, (2, 4, 16, 16), dtype=jnp.float32) * 3.0
    out = jax.block_until_ready(h_swish(x))
    assert out.shape == x.shape and out.dtype == x.dtype
    assert jnp.allclose(out, _h_swish_ref(x), atol=1e-6, rtol=1e-6), "mismatch vs reference"

    # Larger shape: exercises the multi-step grid with a partial last block.
    k1, k2 = jax.random.split(key)
    x2 = jax.random.normal(k1, (8, 64, 56, 56), dtype=jnp.float32) * 3.0
    out2 = jax.block_until_ready(h_swish(x2))
    assert jnp.allclose(out2, _h_swish_ref(x2), atol=1e-6, rtol=1e-6), "mismatch (large)"

    # bf16 storage: kernel upcasts to f32 internally and casts back.
    x3 = (jax.random.normal(k2, (4, 8, 32, 32), dtype=jnp.float32) * 3.0).astype(jnp.bfloat16)
    out3 = jax.block_until_ready(h_swish(x3))
    assert out3.dtype == jnp.bfloat16
    assert jnp.allclose(out3.astype(jnp.float32), _h_swish_ref(x3).astype(jnp.float32),
                        atol=2e-2, rtol=2e-2), "mismatch (bf16)"

    # Unaligned element count: exercises the fused-XLA ragged fallback.
    k3, _ = jax.random.split(k2)
    x4 = jax.random.normal(k3, (2, 3, 17, 19), dtype=jnp.float32) * 3.0
    out4 = jax.block_until_ready(h_swish(x4))
    assert jnp.allclose(out4, _h_swish_ref(x4), atol=1e-6, rtol=1e-6), "mismatch (unaligned)"

    print("KERNEL_OK")
</pallas_src>

<mosaic_0001>
module attributes {stable_mosaic.version = 11 : i64} {
  func.func @_h_swish_kernel(%arg0: i32, %arg1: memref<2x1024xf32, #tpu.memory_space<vmem>>, %arg2: memref<2x1024xf32, #tpu.memory_space<vmem>>) attributes {dimension_semantics = [#tpu.dimension_semantics<parallel>], iteration_bounds = array<i64: 1>, scalar_prefetch = 0 : i64, scratch_operands = 0 : i64, tpu.core_type = #tpu.core_type<tc>, window_params = [{transform_indices = @transform_0, window_bounds = array<i64: 2, 1024>}, {transform_indices = @transform_1, window_bounds = array<i64: 2, 1024>}]} {
    %c0 = arith.constant 0 : index
    %c0_0 = arith.constant 0 : index
    %0 = vector.load %arg1[%c0, %c0_0] : memref<2x1024xf32, #tpu.memory_space<vmem>>, vector<2x1024xf32>
    %cst = arith.constant 3.000000e+00 : f32
    %1 = vector.broadcast %cst : f32 to vector<2x1024xf32>
    %2 = arith.addf %0, %1 : vector<2x1024xf32>
    %cst_1 = arith.constant 0.000000e+00 : f32
    %cst_2 = arith.constant 6.000000e+00 : f32
    %3 = vector.broadcast %cst_1 : f32 to vector<2x1024xf32>
    %4 = arith.maximumf %3, %2 : vector<2x1024xf32>
    %5 = vector.broadcast %cst_2 : f32 to vector<2x1024xf32>
    %6 = arith.minimumf %5, %4 : vector<2x1024xf32>
    %cst_3 = arith.constant 0.166666672 : f32
    %7 = vector.broadcast %cst_3 : f32 to vector<2x1024xf32>
    %8 = arith.mulf %6, %7 : vector<2x1024xf32>
    %9 = arith.mulf %8, %0 : vector<2x1024xf32>
    %c0_4 = arith.constant 0 : index
    %c0_5 = arith.constant 0 : index
    %10 = vector.load %arg2[%c0_4, %c0_5] : memref<2x1024xf32, #tpu.memory_space<vmem>>, vector<2x1024xf32>
    tpu.vector_store %arg2[%c0_4, %c0_5], %9 {strides = array<i32>} : memref<2x1024xf32, #tpu.memory_space<vmem>>, vector<2x1024xf32>,
    return
  }
  func.func @transform_0(%arg0: i32) -> (i32, i32) {
    %c0_i32 = arith.constant 0 : i32
    %c0_i32_0 = arith.constant 0 : i32
    return %arg0, %c0_i32 : i32, i32
  }
  func.func @transform_1(%arg0: i32) -> (i32, i32) {
    %c0_i32 = arith.constant 0 : i32
    %c0_i32_0 = arith.constant 0 : i32
    return %arg0, %c0_i32 : i32, i32
  }
}

</mosaic_0001>

<llo_original>
// kernel: h_swish.1
$region0: #{h_swish.1}
  #allocation0 [shape = 'u32[]', space=smem, size = 0x4, offset = 0x4, fixed_abs, tag = 'smem constant byte address 0x4 - core index']
  #allocation1 [shape = 'u32[72,128]{1,0:T(1,128)}', space=vmem, size = 0x9000, scoped, tag = 'internal scratch']
  %s0 = inlined_call_operand.vmem [shape: f32[2,1024], index: 0, kind: input, shape index: {}]
  %s1 = inlined_call_operand.vmem [shape: f32[2,1024], index: 1, kind: output, shape index: {}]
  %s2 = sld [smem:[#allocation0]]
  $region14: #{h_swish.1} parent=0
    _
  %s4 = ssub.s32 1, %s2
  %s5 = scalar_select 0, %s4, %s2
  // Predicated region
  $region2: #{h_swish.1} parent=0 // pred_check
    _
  $region3: #{h_swish.1} parent=0 // pred_check_branch
    %7 = sbr.rel (0) target = $region5
  $region4: #{h_swish.1} parent=0 // pred_region
    _
  $region5: #{h_swish.1} parent=0 // pred_fallthru
    _
  %v8 = vld [vmem:[%s0] sm:$0xff]
  %v9 = vld [vmem:[%s0 + $0x8] sm:$0xff]
  %v10 = vadd.f32 %v8, 3.0
  %v11 = vadd.f32 %v9, 3.0
  %v12 = vmax.f32 %v10, 0.0
  %v13 = vmax.f32 %v11, 0.0
  %v14 = vmin.f32 %v12, 6.0
  %v15 = vmin.f32 %v13, 6.0
  %v16 = vmul.f32 %v14, 0.16666667
  %v17 = vmul.f32 %v15, 0.16666667
  %v18 = vmul.f32 %v16, %v8
  %v19 = vmul.f32 %v17, %v9
  %20 = vst [vmem:[%s1] sm:$0xff] %v18
  %21 = vst [vmem:[%s1 + $0x8] sm:$0xff] %v19
  // Predicated region
  $region6: #{h_swish.1} parent=0 // pred_check
    _
  $region7: #{h_swish.1} parent=0 // pred_check_branch
    %23 = sbr.rel (0) target = $region9
  $region8: #{h_swish.1} parent=0 // pred_region
    _
  $region9: #{h_swish.1} parent=0 // pred_fallthru
    _
  // Predicated region
  $region10: #{h_swish.1} parent=0 // pred_check
    _
  $region11: #{h_swish.1} parent=0 // pred_check_branch
    %25 = sbr.rel (0) target = $region13
  $region12: #{h_swish.1} parent=0 // pred_region
    _
  $region13: #{h_swish.1} parent=0 // pred_fallthru
    _

</llo_original>
